<compile_context>
chip_gen: v7x
topology: tpu7x:2x2x1
jax: 0.10.0
libtpu: 0.0.40
codegen_flags: <defaults>
</compile_context>

<pallas_src>
import functools

import jax
import jax.numpy as jnp
from jax.experimental import pallas as pl
from jax.experimental.pallas import tpu as pltpu


def _round_up(x: int, m: int) -> int:
    return ((x + m - 1) // m) * m


def _lane_tile(dim: int, cap: int) -> int:
    """Tile size for a lane-mapped dim: >=128, prefer multiples of 256."""
    t = min(cap, _round_up(dim, 128))
    if t >= 256:
        t = (t // 256) * 256  # keep vmatmul pushes full on v6e/v7x (2x256x256 MXU)
    return t


def _linear_kernel(x_ref, w_ref, b_ref, o_ref, acc_ref):
    """One (tm, tn) output tile, accumulated over the K grid axis.

    x_ref:   (tm, tk)  activation tile
    w_ref:   (tk, tn)  weight tile, pre-transposed to (K, N) outside the kernel
    b_ref:   (1, tn)   bias tile (f32)
    o_ref:   (tm, tn)  output tile
    acc_ref: (tm, tn)  f32 accumulator scratch (resident across K)
    """
    k = pl.program_id(2)

    @pl.when(k == 0)
    def _():
        # Fold the bias into the accumulator init -> no finalize add needed.
        acc_ref[...] = jnp.broadcast_to(b_ref[...], acc_ref.shape).astype(jnp.float32)

    acc_ref[...] += jnp.dot(
        x_ref[...], w_ref[...], preferred_element_type=jnp.float32
    )

    @pl.when(k == pl.num_programs(2) - 1)
    def _():
        o_ref[...] = acc_ref[...].astype(o_ref.dtype)


@functools.partial(jax.jit, static_argnames=("tm", "tn", "tk"))
def _linear_pallas(x_p, w_p, b_p, *, tm, tn, tk):
    m_pad, k_pad = x_p.shape
    _, n_pad = w_p.shape
    grid = (m_pad // tm, n_pad // tn, k_pad // tk)
    gm, gn, _ = grid

    flops = 2 * m_pad * n_pad * k_pad
    # Account for re-streams: x is read once per N tile, W once per M tile.
    bytes_accessed = (
        m_pad * k_pad * x_p.dtype.itemsize * gn
        + k_pad * n_pad * w_p.dtype.itemsize * gm
        + n_pad * b_p.dtype.itemsize * gm
        + m_pad * n_pad * 4
    )

    # Double-buffered VMEM footprint; only raise the scoped limit if needed
    # (default caps keep this ~11 MiB, inside every generation's default).
    footprint = (
        2 * tm * tk * x_p.dtype.itemsize
        + 2 * tk * tn * w_p.dtype.itemsize
        + 2 * 1 * tn * b_p.dtype.itemsize
        + 2 * tm * tn * 4  # output (f32), double-buffered
        + tm * tn * 4      # accumulator
    )
    cp_kwargs = dict(dimension_semantics=("parallel", "parallel", "arbitrary"))
    if footprint > 12 * 1024 * 1024:
        cp_kwargs["vmem_limit_bytes"] = min(int(footprint * 1.25), 48 * 1024 * 1024)

    return pl.pallas_call(
        _linear_kernel,
        out_shape=jax.ShapeDtypeStruct((m_pad, n_pad), jnp.float32),
        grid=grid,
        in_specs=[
            pl.BlockSpec((tm, tk), lambda i, j, k: (i, k)),   # x
            pl.BlockSpec((tk, tn), lambda i, j, k: (k, j)),   # W, (K, N) layout
            # TODO(synk): add pipeline_mode=pl.Buffered(3) here if profiling
            # shows exposed weight DMA at small grid_k.
            pl.BlockSpec((1, tn), lambda i, j, k: (0, j)),    # bias
        ],
        out_specs=pl.BlockSpec((tm, tn), lambda i, j, k: (i, j)),
        scratch_shapes=[pltpu.VMEM((tm, tn), jnp.float32)],
        compiler_params=pltpu.CompilerParams(**cp_kwargs),
        cost_estimate=pl.CostEstimate(
            flops=flops, transcendentals=0, bytes_accessed=bytes_accessed
        ),
    )(x_p, w_p, b_p)


class PallasLinear:
    """y = x @ W.T + b. Weight/bias are padded, transposed and cast ONCE here,
    so the per-call hot path only (maybe) pads x and runs the kernel."""

    def __init__(self, weight, bias, *, tm_max=512, tn_max=512, tk_max=1024,
                 compute_dtype=jnp.float32):
        # compute_dtype=jnp.bfloat16 enables the native MXU dtype (f32 accum
        # kept); default f32 matches PyTorch numerics exactly.
        out_dim, in_dim = weight.shape
        assert bias.shape == (out_dim,)
        self.input_dim, self.output_dim = in_dim, out_dim
        self.tm_max = tm_max
        self.compute_dtype = compute_dtype

        self.tn = _lane_tile(out_dim, tn_max)
        self.tk = _lane_tile(in_dim, tk_max)
        self.n_pad = _round_up(out_dim, self.tn)
        self.k_pad = _round_up(in_dim, self.tk)

        # Keep >= 2 output-column tiles when N alone would give a 1-tile grid,
        # so both v7x TensorCores get work even at small batch.
        if self.n_pad // self.tn < 2 and self.tn >= 256 and out_dim > self.tn // 2:
            self.tn //= 2
            self.n_pad = _round_up(out_dim, self.tn)

        # Pre-transpose to (K, N): MXU contracts on W's sublane dim, no per-tile
        # XLU transpose; pad + cast once at parameter-load time.
        w_t = jnp.asarray(weight).T.astype(compute_dtype)
        self.w_p = jnp.pad(
            w_t, ((0, self.k_pad - in_dim), (0, self.n_pad - out_dim))
        )
        self.b_p = (
            jnp.pad(jnp.asarray(bias), (0, self.n_pad - out_dim))
            .reshape(1, self.n_pad)
            .astype(jnp.float32)
        )

    def __call__(self, x):
        lead = x.shape[:-1]
        in_dim = x.shape[-1]
        assert in_dim == self.input_dim
        x2 = x.reshape(-1, in_dim)
        batch = x2.shape[0]

        tm = min(self.tm_max, _round_up(batch, 8))
        # If the grid is still a single output tile, split M when both halves
        # hold real rows (>= 8), so the parallel axes can shard across cores.
        if ((self.n_pad // self.tn) * (_round_up(batch, tm) // tm) < 2
                and tm >= 16 and batch > tm // 2):
            tm = _round_up(tm // 2, 8)
        m_pad = _round_up(batch, tm)

        if (batch, in_dim) != (m_pad, self.k_pad):
            x_p = jnp.pad(x2, ((0, m_pad - batch), (0, self.k_pad - in_dim)))
        else:
            x_p = x2
        x_p = x_p.astype(self.compute_dtype)

        out = _linear_pallas(x_p, self.w_p, self.b_p,
                             tm=tm, tn=self.tn, tk=self.tk)

        if (m_pad, self.n_pad) != (batch, self.output_dim):
            out = out[:batch, :self.output_dim]
        return out.astype(x.dtype).reshape(*lead, self.output_dim)


def lr_forward(x, weight, bias, **kwargs):
    """One-shot convenience wrapper (prepares params every call; for repeated
    use, construct PallasLinear once and reuse it)."""
    return PallasLinear(weight, bias, **kwargs)(x)


if __name__ == "__main__":
    # Small shapes consistent with LR_pytorch(input_dim, output_dim)
    batch, input_dim, output_dim = 8, 32, 16

    key = jax.random.PRNGKey(0)
    kx, kw, kb = jax.random.split(key, 3)

    x = jax.random.normal(kx, (batch, input_dim), dtype=jnp.float32)
    # Deterministic init mimicking nn.Linear's uniform(-1/sqrt(in), 1/sqrt(in))
    bound = 1.0 / jnp.sqrt(jnp.float32(input_dim))
    weight = jax.random.uniform(kw, (output_dim, input_dim),
                                minval=-bound, maxval=bound, dtype=jnp.float32)
    bias = jax.random.uniform(kb, (output_dim,),
                              minval=-bound, maxval=bound, dtype=jnp.float32)

    linear = PallasLinear(weight, bias)   # pad/transpose W once, outside hot path
    y = linear(x)
    jax.block_until_ready(y)

    # Correctness check against the plain-JAX reference
    y_ref = x @ weight.T + bias
    assert y.shape == (batch, output_dim)
    assert jnp.allclose(y, y_ref, atol=1e-5, rtol=1e-5)

    print("KERNEL_OK")
</pallas_src>

<mosaic_0001>
module attributes {stable_mosaic.version = 11 : i64} {
  func.func @_linear_kernel(%arg0: i32, %arg1: i32, %arg2: i32, %arg3: memref<8x128xf32, #tpu.memory_space<vmem>>, %arg4: memref<128x128xf32, #tpu.memory_space<vmem>>, %arg5: memref<1x128xf32, #tpu.memory_space<vmem>>, %arg6: memref<8x128xf32, #tpu.memory_space<vmem>>, %arg7: memref<8x128xf32, #tpu.memory_space<vmem>>) attributes {dimension_semantics = [#tpu.dimension_semantics<parallel>, #tpu.dimension_semantics<parallel>, #tpu.dimension_semantics<arbitrary>], iteration_bounds = array<i64: 1, 1, 1>, scalar_prefetch = 0 : i64, scratch_operands = 1 : i64, tpu.core_type = #tpu.core_type<tc>, window_params = [{transform_indices = @transform_0, window_bounds = array<i64: 8, 128>}, {transform_indices = @transform_1, window_bounds = array<i64: 128, 128>}, {transform_indices = @transform_2, window_bounds = array<i64: 1, 128>}, {transform_indices = @transform_3, window_bounds = array<i64: 8, 128>}]} {
    %c0_i32 = arith.constant 0 : i32
    %0 = arith.cmpi eq, %arg2, %c0_i32 : i32
    %1 = arith.extui %0 : i1 to i32
    %c0_i32_0 = arith.constant 0 : i32
    %2 = arith.cmpi ne, %1, %c0_i32_0 : i32
    scf.if %2 {
      %c0_10 = arith.constant 0 : index
      %c0_11 = arith.constant 0 : index
      %12 = vector.load %arg5[%c0_10, %c0_11] : memref<1x128xf32, #tpu.memory_space<vmem>>, vector<1x128xf32>
      %13 = vector.shape_cast %12 : vector<1x128xf32> to vector<1x128xf32>
      %14 = vector.broadcast %13 : vector<1x128xf32> to vector<8x128xf32>
      %c0_12 = arith.constant 0 : index
      %c0_13 = arith.constant 0 : index
      %15 = vector.load %arg7[%c0_12, %c0_13] : memref<8x128xf32, #tpu.memory_space<vmem>>, vector<8x128xf32>
      tpu.vector_store %arg7[%c0_12, %c0_13], %14 {strides = array<i32>} : memref<8x128xf32, #tpu.memory_space<vmem>>, vector<8x128xf32>,
    } else {
    }
    %c0 = arith.constant 0 : index
    %c0_1 = arith.constant 0 : index
    %3 = vector.load %arg7[%c0, %c0_1] : memref<8x128xf32, #tpu.memory_space<vmem>>, vector<8x128xf32>
    %c0_2 = arith.constant 0 : index
    %c0_3 = arith.constant 0 : index
    %4 = vector.load %arg3[%c0_2, %c0_3] : memref<8x128xf32, #tpu.memory_space<vmem>>, vector<8x128xf32>
    %c0_4 = arith.constant 0 : index
    %c0_5 = arith.constant 0 : index
    %5 = vector.load %arg4[%c0_4, %c0_5] : memref<128x128xf32, #tpu.memory_space<vmem>>, vector<128x128xf32>
    %cst = arith.constant dense<0.000000e+00> : vector<8x128xf32>
    %6 = tpu.matmul %4, %5, %cst {dimension_numbers = #tpu.dot_dimension_numbers<[1], [0], [0], [1], [0, 0, 1, 1], [], []>} : vector<8x128xf32>, vector<128x128xf32>, vector<8x128xf32> -> vector<8x128xf32>
    %7 = arith.addf %3, %6 : vector<8x128xf32>
    %c0_6 = arith.constant 0 : index
    %c0_7 = arith.constant 0 : index
    %8 = vector.load %arg7[%c0_6, %c0_7] : memref<8x128xf32, #tpu.memory_space<vmem>>, vector<8x128xf32>
    tpu.vector_store %arg7[%c0_6, %c0_7], %7 {strides = array<i32>} : memref<8x128xf32, #tpu.memory_space<vmem>>, vector<8x128xf32>,
    %c0_i32_8 = arith.constant 0 : i32
    %9 = arith.cmpi eq, %arg2, %c0_i32_8 : i32
    %10 = arith.extui %9 : i1 to i32
    %c0_i32_9 = arith.constant 0 : i32
    %11 = arith.cmpi ne, %10, %c0_i32_9 : i32
    scf.if %11 {
      %c0_10 = arith.constant 0 : index
      %c0_11 = arith.constant 0 : index
      %12 = vector.load %arg7[%c0_10, %c0_11] : memref<8x128xf32, #tpu.memory_space<vmem>>, vector<8x128xf32>
      %c0_12 = arith.constant 0 : index
      %c0_13 = arith.constant 0 : index
      %13 = vector.load %arg6[%c0_12, %c0_13] : memref<8x128xf32, #tpu.memory_space<vmem>>, vector<8x128xf32>
      tpu.vector_store %arg6[%c0_12, %c0_13], %12 {strides = array<i32>} : memref<8x128xf32, #tpu.memory_space<vmem>>, vector<8x128xf32>,
    } else {
    }
    return
  }
  func.func @transform_0(%arg0: i32, %arg1: i32, %arg2: i32) -> (i32, i32) {
    %c0_i32 = arith.constant 0 : i32
    return %arg0, %arg2 : i32, i32
  }
  func.func @transform_1(%arg0: i32, %arg1: i32, %arg2: i32) -> (i32, i32) {
    %c0_i32 = arith.constant 0 : i32
    return %arg2, %arg1 : i32, i32
  }
  func.func @transform_2(%arg0: i32, %arg1: i32, %arg2: i32) -> (i32, i32) {
    %c0_i32 = arith.constant 0 : i32
    %c0_i32_0 = arith.constant 0 : i32
    return %c0_i32, %arg1 : i32, i32
  }
  func.func @transform_3(%arg0: i32, %arg1: i32, %arg2: i32) -> (i32, i32) {
    %c0_i32 = arith.constant 0 : i32
    return %arg0, %arg1 : i32, i32
  }
}

</mosaic_0001>

<llo_original>
// kernel: _linear_pallas.1
$region0: #{_linear_pallas.1}
  #allocation0 [shape = 'u32[]', space=smem, size = 0x4, offset = 0x4, fixed_abs, tag = 'smem constant byte address 0x4 - core index']
  #allocation1 [shape = 'u32[144,128]{1,0:T(1,128)}', space=vmem, size = 0x12000, scoped, tag = 'internal scratch']
  #allocation2 [shape = 'f32[8,128]{1,0:T(8,128)}', space=vmem, size = 0x1000, scoped, tag = 'scratch operand']
  %s0 = inlined_call_operand.hbm [shape: f32[8,128], index: 0, kind: input, shape index: {}]
  %s1 = inlined_call_operand.hbm [shape: f32[128,128], index: 1, kind: input, shape index: {}]
  %s2 = inlined_call_operand.vmem [shape: f32[1,128], index: 2, kind: input, shape index: {}]
  %s3 = inlined_call_operand.hbm [shape: f32[8,128], index: 3, kind: output, shape index: {}]
  %s4 = sld [smem:[#allocation0]]
  $region38: #{_linear_pallas.1} parent=0
    _
  %s6 = ssub.s32 1, %s4
  %s7 = scalar_select 0, %s6, %s4
  $region1: #{_linear_pallas.1} parent=0
    #allocation3 [shape = 'u8[4096]{0}', space=vmem, size = 0x1000, scoped, tag = 'input window, operand 0, single buffered']
    #allocation4 [shape = 's32[1]{0}', space=sflag, size = 0x4, scoped, tag = 'scoped memory for _linear_pallas.1']
    #allocation5 [shape = 's32[1]{0}', space=sflag, size = 0x4, scoped, tag = 'scoped memory for _linear_pallas.1']
    #allocation6 [shape = 'u8[65536]{0}', space=vmem, size = 0x10000, scoped, tag = 'input window, operand 1, single buffered']
    #allocation7 [shape = 's32[1]{0}', space=sflag, size = 0x4, scoped, tag = 'scoped memory for _linear_pallas.1']
    #allocation8 [shape = 'u8[4096]{0}', space=vmem, size = 0x1000, scoped, tag = 'output window, operand 0, single buffered']
    %8 = vsyncpa [#allocation4], 0
    %9 = vsyncpa [#allocation7], 0
    %10 = vsyncpa [#allocation5], 0
    // Predicated region
    $region2: #{_linear_pallas.1} parent=1 // pred_check
      _
    $region3: #{_linear_pallas.1} parent=1 // pred_check_branch
      %12 = sbr.rel (0) target = $region5
    $region4: #{_linear_pallas.1} parent=1 // pred_region
      %s14 = ssub.s32 128, 128
      %15 = vsyncadd [#allocation4], %s14
      %s17 = sshll.u32 [#allocation3], 4
      %s18 = int_to_ptr.vmem [resolvable:$true] %s17
      %20 = dma.hbm_to_vmem [thread:$0]  %s0, 128, %s18, [#allocation4]
    $region5: #{_linear_pallas.1} parent=1 // pred_fallthru
      _
    // Predicated region
    $region6: #{_linear_pallas.1} parent=1 // pred_check
      _
    $region7: #{_linear_pallas.1} parent=1 // pred_check_branch
      %22 = sbr.rel (0) target = $region9
    $region8: #{_linear_pallas.1} parent=1 // pred_region
      %s24 = ssub.s32 2048, 2048
      %25 = vsyncadd [#allocation7], %s24
      %s26 = sshll.u32 [#allocation6], 4
      %s27 = int_to_ptr.vmem [resolvable:$true] %s26
      %32 = dma.hbm_to_vmem [thread:$0]  %s1, 2048, %s27, [#allocation7], 128, 128, 8
    $region9: #{_linear_pallas.1} parent=1 // pred_fallthru
      _
    // Predicated region
    $region10: #{_linear_pallas.1} parent=1 // pred_check
      _
    $region11: #{_linear_pallas.1} parent=1 // pred_check_branch
      %34 = sbr.rel (0) target = $region13
    $region12: #{_linear_pallas.1} parent=1 // pred_region
      _
    $region13: #{_linear_pallas.1} parent=1 // pred_fallthru
      _
    // Predicated region
    $region14: #{_linear_pallas.1} parent=1 // pred_check
      _
    $region15: #{_linear_pallas.1} parent=1 // pred_check_branch
      %36 = sbr.rel (0) target = $region17
    $region16: #{_linear_pallas.1} parent=1 // pred_region
      %37 = dma.done [#allocation4], 128
    $region17: #{_linear_pallas.1} parent=1 // pred_fallthru
      _
    // Predicated region
    $region18: #{_linear_pallas.1} parent=1 // pred_check
      _
    $region19: #{_linear_pallas.1} parent=1 // pred_check_branch
      %39 = sbr.rel (0) target = $region21
    $region20: #{_linear_pallas.1} parent=1 // pred_region
      %40 = dma.done [#allocation7], 2048
    $region21: #{_linear_pallas.1} parent=1 // pred_fallthru
      _
    %p41 = scmp.eq.s32.totalorder 0, 0
    // Predicated region
    $region22: #{_linear_pallas.1} parent=1 // pred_check
      %p42 = pneg %p41
    $region23: #{_linear_pallas.1} parent=1 // pred_check_branch
      %44 = sbr.rel (%p42) target = $region25
    $region24: #{_linear_pallas.1} parent=1 // pred_region
      %v45 = vld [vmem:[%s2] sm:$0x1]
      %v47 = vlaneseq
      %v48 = vshrl.u32 %v47, 7
      %v49 = vsub.s32 0, %v48
      %v50 = vrot.slane %v45, %v49
      %52 = vst [vmem:[#allocation2] sm:$0xff] %v50
    $region25: #{_linear_pallas.1} parent=1 // pred_fallthru
      _
    %v53 = vld [vmem:[#allocation2] sm:$0xff]
    %v54 = vld [vmem:[#allocation3] sm:$0xff]
    %v55 = vld [vmem:[#allocation6] sm:$0xff]
    %v56 = vld [vmem:[#allocation6 + $0x8] sm:$0xff]
    %v57 = vld [vmem:[#allocation6 + $0x10] sm:$0xff]
    %v58 = vld [vmem:[#allocation6 + $0x18] sm:$0xff]
    %v59 = vld [vmem:[#allocation6 + $0x20] sm:$0xff]
    %v60 = vld [vmem:[#allocation6 + $0x28] sm:$0xff]
    %v61 = vld [vmem:[#allocation6 + $0x30] sm:$0xff]
    %v62 = vld [vmem:[#allocation6 + $0x38] sm:$0xff]
    %v63 = vld [vmem:[#allocation6 + $0x40] sm:$0xff]
    %v64 = vld [vmem:[#allocation6 + $0x48] sm:$0xff]
    %v65 = vld [vmem:[#allocation6 + $0x50] sm:$0xff]
    %v66 = vld [vmem:[#allocation6 + $0x58] sm:$0xff]
    %v67 = vld [vmem:[#allocation6 + $0x60] sm:$0xff]
    %v68 = vld [vmem:[#allocation6 + $0x68] sm:$0xff]
    %v69 = vld [vmem:[#allocation6 + $0x70] sm:$0xff]
    %v70 = vld [vmem:[#allocation6 + $0x78] sm:$0xff]
    %71 = vmatprep.subr.mxu0 0.0
    %72 = vmatpush1.msra.mxu0 %v55
    %73 = vmatprep.subr.mxu0 0.0
    %74 = vmatpush1.msra.mxu0 %v56
    %75 = vmatprep.subr.mxu0 0.0
    %76 = vmatpush1.msra.mxu0 %v57
    %77 = vmatprep.subr.mxu0 0.0
    %78 = vmatpush1.msra.mxu0 %v58
    %79 = vmatprep.subr.mxu0 0.0
    %80 = vmatpush1.msra.mxu0 %v59
    %81 = vmatprep.subr.mxu0 0.0
    %82 = vmatpush1.msra.mxu0 %v60
    %83 = vmatprep.subr.mxu0 0.0
    %84 = vmatpush1.msra.mxu0 %v61
    %85 = vmatprep.subr.mxu0 0.0
    %86 = vmatpush1.msra.mxu0 %v62
    %87 = vmatprep.subr.mxu0 0.0
    %88 = vmatpush1.msra.mxu0 %v63
    %89 = vmatprep.subr.mxu0 0.0
    %90 = vmatpush1.msra.mxu0 %v64
    %91 = vmatprep.subr.mxu0 0.0
    %92 = vmatpush1.msra.mxu0 %v65
    %93 = vmatprep.subr.mxu0 0.0
    %94 = vmatpush1.msra.mxu0 %v66
    %95 = vmatprep.subr.mxu0 0.0
    %96 = vmatpush1.msra.mxu0 %v67
    %97 = vmatprep.subr.mxu0 0.0
    %98 = vmatpush1.msra.mxu0 %v68
    %99 = vmatprep.subr.mxu0 0.0
    %100 = vmatpush1.msra.mxu0 %v69
    %101 = vmatprep.subr.mxu0 0.0
    %102 = vmatpush1.msra.mxu0 %v70
    %103 = vmatprep.subr.mxu0 0.0
    %104 = vmatpush1.msra.mxu0 0.0
    %105 = vmatprep.subr.mxu0 0.0
    %106 = vmatpush1.msra.mxu0 0.0
    %107 = vmatprep.subr.mxu0 0.0
    %108 = vmatpush1.msra.mxu0 0.0
    %109 = vmatprep.subr.mxu0 0.0
    %110 = vmatpush1.msra.mxu0 0.0
    %111 = vmatprep.subr.mxu0 0.0
    %112 = vmatpush1.msra.mxu0 0.0
    %113 = vmatprep.subr.mxu0 0.0
    %114 = vmatpush1.msra.mxu0 0.0
    %115 = vmatprep.subr.mxu0 0.0
    %116 = vmatpush1.msra.mxu0 0.0
    %117 = vmatprep.subr.mxu0 0.0
    %118 = vmatpush1.msra.mxu0 0.0
    %119 = vmatprep.subr.mxu0 0.0
    %120 = vmatpush1.msra.mxu0 0.0
    %121 = vmatprep.subr.mxu0 0.0
    %122 = vmatpush1.msra.mxu0 0.0
    %123 = vmatprep.subr.mxu0 0.0
    %124 = vmatpush1.msra.mxu0 0.0
    %125 = vmatprep.subr.mxu0 0.0
    %126 = vmatpush1.msra.mxu0 0.0
    %127 = vmatprep.subr.mxu0 0.0
    %128 = vmatpush1.msra.mxu0 0.0
    %129 = vmatprep.subr.mxu0 0.0
    %130 = vmatpush1.msra.mxu0 0.0
    %131 = vmatprep.subr.mxu0 0.0
    %132 = vmatpush1.msra.mxu0 0.0
    %133 = vmatprep.subr.mxu0 0.0
    %134 = vmatpush1.msra.mxu0 0.0
    %135 = vmatprep.mubr.f32.mxu0 0.0
    %136 = vmatmul.mubr.f32.gmra.mrb[0].mxu0 %v54
    %v137 = vpop.f32.mrb[0].mxu0
    %v138 = vadd.f32 0.0, %v137
    %v139 = vpop.f32.mrb[0].mxu0
    %140 = vdwg.mxu0
    %v141 = vadd.f32 %v53, %v138
    %142 = vst [vmem:[#allocation2] sm:$0xff] %v141
    // Predicated region
    $region26: #{_linear_pallas.1} parent=1 // pred_check
      %p143 = pneg %p41
    $region27: #{_linear_pallas.1} parent=1 // pred_check_branch
      %145 = sbr.rel (%p143) target = $region29
    $region28: #{_linear_pallas.1} parent=1 // pred_region
      %v146 = vld [vmem:[#allocation2] sm:$0xff]
      %147 = vst [vmem:[#allocation8] sm:$0xff] %v146
    $region29: #{_linear_pallas.1} parent=1 // pred_fallthru
      _
    // Predicated region
    $region30: #{_linear_pallas.1} parent=1 // pred_check
      _
    $region31: #{_linear_pallas.1} parent=1 // pred_check_branch
      %149 = sbr.rel (0) target = $region33
    $region32: #{_linear_pallas.1} parent=1 // pred_region
      %s151 = ssub.s32 128, 128
      %152 = vsyncadd [#allocation5], %s151
      %s154 = sshll.u32 [#allocation8], 4
      %s155 = int_to_ptr.vmem [resolvable:$true] %s154
      %157 = dma.vmem_to_hbm [thread:$0]  %s155, 128, %s3, [#allocation5]
    $region33: #{_linear_pallas.1} parent=1 // pred_fallthru
      _
    // Predicated region
    $region34: #{_linear_pallas.1} parent=1 // pred_check
      _
    $region35: #{_linear_pallas.1} parent=1 // pred_check_branch
      %159 = sbr.rel (0) target = $region37
    $region36: #{_linear_pallas.1} parent=1 // pred_region
      %160 = dma.done [#allocation5], 128
    $region37: #{_linear_pallas.1} parent=1 // pred_fallthru
      _
    %161 = vsyncpa [#allocation4], 1
    %162 = vsyncpa [#allocation7], 1
    %163 = vsyncpa [#allocation5], 1

</llo_original>
